<compile_context>
chip_gen: v5e
topology: v5e:2x2
jax: 0.10.0
libtpu: 0.0.40
codegen_flags: <defaults>
</compile_context>

<pallas_src>
import jax
import jax.numpy as jnp
from jax.experimental import pallas as pl
from jax.experimental.pallas import tpu as pltpu


def _round_up(a, m):
    return (a + m - 1) // m * m


def _vmem_capacity_bytes():
    """Physical per-core VMEM; falls back to the smallest current part (v7x, 64 MiB)."""
    try:
        cap = getattr(pltpu.get_tpu_info(), "vmem_capacity_bytes", None)
        if cap:
            return int(cap)
    except Exception:
        pass
    return 64 * 1024 * 1024


def _switcher_tile_kernel(n_experts, t_total, tile_t):
    """Per-tile router kernel: lane-dense top-1 indices + merged fi/Pi partials."""
    N = n_experts

    def kernel(x_ref, w_ref, b_ref, idx_ref, fp_ref):
        x = x_ref[...]                                                    # (tile, D)
        logits = jnp.dot(x, w_ref[...],
                         preferred_element_type=jnp.float32) + b_ref[...]  # (tile, N)

        # softmax over experts; exact divide (kernel is HBM-bound, VPU/EUP have
        # huge slack, so no approx-reciprocal perturbation on the loss)
        m = jnp.max(logits, axis=-1, keepdims=True)                       # (tile, 1)
        e = jnp.exp(logits - m)
        gate = e / jnp.sum(e, axis=-1, keepdims=True)                     # (tile, N)

        # top-1 expert per token: first maximal index (argmax(softmax(z)) == argmax(z))
        col = jax.lax.broadcasted_iota(jnp.int32, (tile_t, N), 1)
        cand = jnp.where(logits == m, col, N)                             # sentinel N
        expert_idx = jnp.min(cand, axis=-1, keepdims=True)                # (tile, 1)
        onehot = (col == expert_idx).astype(jnp.float32)                  # (tile, N)

        # Lane-dense index row via a tiny MXU dot: idx[t] = sum_j j*onehot[t,j].
        # Avoids a width-1 masked-store output and any sublane->lane relayout.
        colf = jax.lax.broadcasted_iota(jnp.int32, (1, N), 1).astype(jnp.float32)
        idx_row = jax.lax.dot_general(
            colf, onehot, dimension_numbers=(((1,), (1,)), ((), ())),
            preferred_element_type=jnp.float32)                           # (1, tile)
        idx_ref[...] = idx_row.astype(jnp.int32).reshape(1, 1, tile_t)

        # mask rows padded past the true token count (built directly as a row)
        lane = jax.lax.broadcasted_iota(jnp.int32, (1, tile_t), 1)
        valid = ((lane + pl.program_id(0) * tile_t) < t_total).astype(jnp.float32)

        # partial fi / Pi sums via (1, tile) @ (tile, N) MXU dots instead of
        # axis-0 (sublane) XLU reductions; merged into one output block so each
        # grid step issues a single tiny writeback.
        fi_part = jnp.dot(valid, onehot, preferred_element_type=jnp.float32)  # (1, N)
        pi_part = jnp.dot(valid, gate, preferred_element_type=jnp.float32)    # (1, N)
        fp_ref[0, 0:1, :] = fi_part
        fp_ref[0, 1:2, :] = pi_part

    return kernel


def switcher_forward(x, w, b, *, alpha, num_experts, tile_t=None):
    """x: (T, d_in) f32; w: (d_in, N) f32; b: (1, N) f32.
    Returns (loss scalar f32, indices (T, 1) int32)."""
    T, D = x.shape
    N = num_experts
    assert w.shape == (D, N) and b.shape == (1, N)

    # ---- generation-aware, lane-padding-aware tile sizing --------------------
    vmem_cap = _vmem_capacity_bytes()
    d_pad = _round_up(D, 128)
    n_pad = _round_up(N, 128)
    # VMEM bytes per token row of a tile (f32, lane-padded layouts):
    per_row = (2 * d_pad * 4          # double-buffered x block
               + 10 * n_pad * 4       # live (tile, N) temporaries (logits/e/gate/col/...)
               + 2 * 8 * 4)           # lane-dense idx output block (sublane-padded), x2 bufs
    fixed = (2 * _round_up(D, 8) * n_pad * 4     # resident weights (double-buffered)
             + 2 * 8 * n_pad * 4                 # bias
             + (2 << 20))                        # compiler slack
    budget = int(0.55 * vmem_cap)                # ~35 MiB on v7x, ~70 MiB on v5e/v6e
    cap_rows = max(8, (budget - fixed) // per_row)

    # HBM-traffic target: ~2 MiB of x streamed per grid step to amortize the
    # ~0.35us per-step overhead (with small D this is the dominant effect).
    target_rows = max(8, (2 << 20) // max(D * 4, 1))
    tile = min(cap_rows, target_rows, 32768)
    if tile_t is not None:
        tile = min(tile, tile_t)
    # Keep at least 2 grid steps when there is enough work so the "parallel"
    # grid axis can be split across v7x's two TensorCores.
    if T > 16:
        tile = min(tile, _round_up(-(-T // 2), 8))
    tile = max(8, _round_up(min(tile, _round_up(T, 8)), 8))

    num_tiles = pl.cdiv(T, tile)
    t_pad = num_tiles * tile
    if t_pad != T:
        x = jnp.pad(x, ((0, t_pad - T), (0, 0)))

    vmem_need = fixed + per_row * tile
    vmem_limit = int(min(max(vmem_need, 16 << 20), max(budget, 16 << 20)))

    cost = pl.CostEstimate(
        flops=2 * t_pad * D * N + 3 * 2 * t_pad * N,      # router matmul + 3 reduction dots
        transcendentals=t_pad * N,                        # exp
        bytes_accessed=(t_pad * D * 4 + D * N * 4 + N * 4
                        + t_pad * 4 + num_tiles * 2 * N * 4),
    )

    idx, fp_part = pl.pallas_call(
        _switcher_tile_kernel(N, T, tile),
        out_shape=(
            jax.ShapeDtypeStruct((num_tiles, 1, tile), jnp.int32),   # lane-dense top-1 idx
            jax.ShapeDtypeStruct((num_tiles, 2, N), jnp.float32),    # merged fi / Pi partials
        ),
        grid=(num_tiles,),
        in_specs=[
            pl.BlockSpec((tile, D), lambda i: (i, 0)),    # stream token tiles
            pl.BlockSpec((D, N), lambda i: (0, 0)),       # weights stay resident
            pl.BlockSpec((1, N), lambda i: (0, 0)),       # bias stays resident
        ],
        out_specs=(
            pl.BlockSpec((1, 1, tile), lambda i: (i, 0, 0)),
            pl.BlockSpec((1, 2, N), lambda i: (i, 0, 0)),
        ),
        compiler_params=pltpu.CompilerParams(
            dimension_semantics=("parallel",),            # no cross-tile state
            vmem_limit_bytes=vmem_limit),
        cost_estimate=cost,
    )(x, w, b)

    # tiny epilogue reduction in plain JAX (normalize by the true global T)
    fp = jnp.sum(fp_part, axis=0)                   # (2, N)
    fi = fp[0] / T
    Pi = fp[1] / T
    loss = alpha * N * jnp.sum(fi * Pi)
    indices = idx.reshape(t_pad)[:T][:, None]       # (T, 1) int32, like topk(k=1)
    return loss, indices


def _reference(x, w, b, alpha, N):
    gate = jax.nn.softmax(x @ w + b, axis=-1)
    ref_idx = jnp.argmax(gate, axis=-1)
    fi = jnp.mean(jax.nn.one_hot(ref_idx, N, dtype=jnp.float32), axis=0)
    Pi = jnp.mean(gate, axis=0)
    ref_loss = alpha * N * jnp.sum(fi * Pi)
    return ref_loss, ref_idx.astype(jnp.int32)


def _check(loss, idx, x, w, b, alpha, N):
    ref_loss, ref_idx = _reference(x, w, b, alpha, N)
    assert jnp.allclose(loss, ref_loss, rtol=1e-4, atol=1e-8), (loss, ref_loss)
    # exact index parity except where the top-2 logits are numerically tied
    logits = x @ w + b
    srt = jnp.sort(logits, axis=-1)
    gap = srt[:, -1] - srt[:, -2]
    ok = (idx[:, 0] == ref_idx) | (gap < 1e-5)
    assert bool(jnp.all(ok))


if __name__ == "__main__":
    # SwitcherConfig(d_in=32, num_experts=8, alpha=0.01, capacity_factor=1.25, k=1)
    T, D, N = 8, 32, 8
    alpha = 0.01

    key = jax.random.PRNGKey(0)
    kx, kw, kb = jax.random.split(key, 3)
    x = jax.random.normal(kx, (T, D), dtype=jnp.float32)
    # nn.Linear(d_in, N): weight (N, d_in), bias (N,).  Stored transposed here.
    w = (jax.random.uniform(kw, (N, D), dtype=jnp.float32,
                            minval=-1.0, maxval=1.0) / jnp.sqrt(D)).T    # (D, N)
    b = (jax.random.uniform(kb, (1, N), dtype=jnp.float32,
                            minval=-1.0, maxval=1.0) / jnp.sqrt(D))

    loss, idx = switcher_forward(x, w, b, alpha=alpha, num_experts=N)
    jax.block_until_ready((loss, idx))
    _check(loss, idx, x, w, b, alpha, N)

    # tiled + padded-row path (T not a multiple of the tile)
    T2 = 300
    x2 = jax.random.normal(jax.random.PRNGKey(1), (T2, D), dtype=jnp.float32)
    loss2, idx2 = switcher_forward(x2, w, b, alpha=alpha, num_experts=N, tile_t=128)
    jax.block_until_ready((loss2, idx2))
    _check(loss2, idx2, x2, w, b, alpha, N)

    # auto-tiled path (byte-targeted tile + the >=2-tile split both engage)
    T3 = 4096
    x3 = jax.random.normal(jax.random.PRNGKey(2), (T3, D), dtype=jnp.float32)
    loss3, idx3 = switcher_forward(x3, w, b, alpha=alpha, num_experts=N)
    jax.block_until_ready((loss3, idx3))
    _check(loss3, idx3, x3, w, b, alpha, N)

    print("KERNEL_OK")
</pallas_src>

<mosaic_0001>
module attributes {stable_mosaic.version = 11 : i64} {
  func.func @kernel(%arg0: i32, %arg1: memref<8x32xf32, #tpu.memory_space<vmem>>, %arg2: memref<32x8xf32, #tpu.memory_space<vmem>>, %arg3: memref<1x8xf32, #tpu.memory_space<vmem>>, %arg4: memref<1x1x8xi32, #tpu.memory_space<vmem>>, %arg5: memref<1x2x8xf32, #tpu.memory_space<vmem>>) attributes {dimension_semantics = [#tpu.dimension_semantics<parallel>], iteration_bounds = array<i64: 1>, scalar_prefetch = 0 : i64, scratch_operands = 0 : i64, tpu.core_type = #tpu.core_type<tc>, window_params = [{transform_indices = @transform_0, window_bounds = array<i64: 8, 32>}, {pipeline_mode = #tpu.pipeline_mode<synchronous>, transform_indices = @transform_1, window_bounds = array<i64: 32, 8>}, {pipeline_mode = #tpu.pipeline_mode<synchronous>, transform_indices = @transform_2, window_bounds = array<i64: 1, 8>}, {transform_indices = @transform_3, window_bounds = array<i64: 1, 1, 8>}, {transform_indices = @transform_4, window_bounds = array<i64: 1, 2, 8>}]} {
    %c0 = arith.constant 0 : index
    %c0_0 = arith.constant 0 : index
    %0 = vector.load %arg1[%c0, %c0_0] : memref<8x32xf32, #tpu.memory_space<vmem>>, vector<8x32xf32>
    %c0_1 = arith.constant 0 : index
    %c0_2 = arith.constant 0 : index
    %1 = vector.load %arg2[%c0_1, %c0_2] : memref<32x8xf32, #tpu.memory_space<vmem>>, vector<32x8xf32>
    %cst = arith.constant dense<0.000000e+00> : vector<8x8xf32>
    %2 = tpu.matmul %0, %1, %cst {dimension_numbers = #tpu.dot_dimension_numbers<[1], [0], [0], [1], [0, 0, 1, 1], [], []>} : vector<8x32xf32>, vector<32x8xf32>, vector<8x8xf32> -> vector<8x8xf32>
    %c0_3 = arith.constant 0 : index
    %c0_4 = arith.constant 0 : index
    %3 = vector.load %arg3[%c0_3, %c0_4] : memref<1x8xf32, #tpu.memory_space<vmem>>, vector<1x8xf32>
    %4 = vector.broadcast %3 : vector<1x8xf32> to vector<8x8xf32>
    %5 = arith.addf %2, %4 : vector<8x8xf32>
    %cst_5 = arith.constant dense<0xFF800000> : vector<8xf32>
    %6 = vector.multi_reduction <maximumf>, %5, %cst_5 [1] : vector<8x8xf32> to vector<8xf32>
    %7 = vector.shape_cast %6 : vector<8xf32> to vector<8x1xf32>
    %8 = vector.broadcast %7 : vector<8x1xf32> to vector<8x8xf32>
    %9 = arith.subf %5, %8 : vector<8x8xf32>
    %10 = math.exp %9 : vector<8x8xf32>
    %cst_6 = arith.constant dense<0.000000e+00> : vector<8xf32>
    %11 = vector.multi_reduction <add>, %10, %cst_6 [1] : vector<8x8xf32> to vector<8xf32>
    %12 = vector.shape_cast %11 : vector<8xf32> to vector<8x1xf32>
    %13 = vector.broadcast %12 : vector<8x1xf32> to vector<8x8xf32>
    %14 = arith.divf %10, %13 : vector<8x8xf32>
    %15 = tpu.iota {dimensions = array<i32: 1>} : vector<8x8xi32>
    %16 = vector.broadcast %7 : vector<8x1xf32> to vector<8x8xf32>
    %17 = arith.cmpf oeq, %5, %16 : vector<8x8xf32>
    %c8_i32 = arith.constant 8 : i32
    %18 = vector.broadcast %c8_i32 : i32 to vector<8x8xi32>
    %19 = arith.select %17, %15, %18 : vector<8x8xi1>, vector<8x8xi32>
    %cst_7 = arith.constant dense<2147483647> : vector<8xi32>
    %20 = vector.multi_reduction <minsi>, %19, %cst_7 [1] : vector<8x8xi32> to vector<8xi32>
    %21 = vector.shape_cast %20 : vector<8xi32> to vector<8x1xi32>
    %22 = vector.broadcast %21 : vector<8x1xi32> to vector<8x8xi32>
    %23 = arith.cmpi eq, %15, %22 : vector<8x8xi32>
    %24 = arith.extui %23 : vector<8x8xi1> to vector<8x8xi32>
    %25 = arith.sitofp %24 : vector<8x8xi32> to vector<8x8xf32>
    %26 = tpu.iota {dimensions = array<i32: 1>} : vector<1x8xi32>
    %27 = arith.sitofp %26 : vector<1x8xi32> to vector<1x8xf32>
    %cst_8 = arith.constant dense<0.000000e+00> : vector<1x8xf32>
    %28 = tpu.matmul %27, %25, %cst_8 {dimension_numbers = #tpu.dot_dimension_numbers<[1], [1], [0], [0], [0, 0, 1, 0], [], []>} : vector<1x8xf32>, vector<8x8xf32>, vector<1x8xf32> -> vector<1x8xf32>
    %29 = arith.fptosi %28 : vector<1x8xf32> to vector<1x8xi32>
    %30 = vector.shape_cast %29 : vector<1x8xi32> to vector<1x1x8xi32>
    %c0_9 = arith.constant 0 : index
    %c0_10 = arith.constant 0 : index
    %c0_11 = arith.constant 0 : index
    %31 = vector.load %arg4[%c0_9, %c0_10, %c0_11] : memref<1x1x8xi32, #tpu.memory_space<vmem>>, vector<1x1x8xi32>
    tpu.vector_store %arg4[%c0_9, %c0_10, %c0_11], %30 {strides = array<i32>} : memref<1x1x8xi32, #tpu.memory_space<vmem>>, vector<1x1x8xi32>,
    %32 = tpu.iota {dimensions = array<i32: 1>} : vector<1x8xi32>
    %c8_i32_12 = arith.constant 8 : i32
    %33 = arith.muli %arg0, %c8_i32_12 : i32
    %34 = vector.broadcast %33 : i32 to vector<1x8xi32>
    %35 = arith.addi %32, %34 : vector<1x8xi32>
    %c8_i32_13 = arith.constant 8 : i32
    %36 = vector.broadcast %c8_i32_13 : i32 to vector<1x8xi32>
    %37 = arith.cmpi slt, %35, %36 : vector<1x8xi32>
    %38 = arith.extui %37 : vector<1x8xi1> to vector<1x8xi32>
    %39 = arith.sitofp %38 : vector<1x8xi32> to vector<1x8xf32>
    %cst_14 = arith.constant dense<0.000000e+00> : vector<1x8xf32>
    %40 = tpu.matmul %39, %25, %cst_14 {dimension_numbers = #tpu.dot_dimension_numbers<[1], [0], [0], [1], [0, 0, 1, 1], [], []>} : vector<1x8xf32>, vector<8x8xf32>, vector<1x8xf32> -> vector<1x8xf32>
    %cst_15 = arith.constant dense<0.000000e+00> : vector<1x8xf32>
    %41 = tpu.matmul %39, %14, %cst_15 {dimension_numbers = #tpu.dot_dimension_numbers<[1], [0], [0], [1], [0, 0, 1, 1], [], []>} : vector<1x8xf32>, vector<8x8xf32>, vector<1x8xf32> -> vector<1x8xf32>
    %c0_16 = arith.constant 0 : index
    %c0_17 = arith.constant 0 : index
    %c0_18 = arith.constant 0 : index
    %42 = vector.load %arg5[%c0_16, %c0_17, %c0_18] : memref<1x2x8xf32, #tpu.memory_space<vmem>>, vector<1x1x8xf32>
    %43 = vector.shape_cast %42 : vector<1x1x8xf32> to vector<1x8xf32>
    %44 = vector.shape_cast %40 : vector<1x8xf32> to vector<1x1x8xf32>
    tpu.vector_store %arg5[%c0_16, %c0_17, %c0_18], %44 {strides = array<i32>} : memref<1x2x8xf32, #tpu.memory_space<vmem>>, vector<1x1x8xf32>,
    %c0_19 = arith.constant 0 : index
    %c1 = arith.constant 1 : index
    %c0_20 = arith.constant 0 : index
    %45 = vector.load %arg5[%c0_19, %c1, %c0_20] : memref<1x2x8xf32, #tpu.memory_space<vmem>>, vector<1x1x8xf32>
    %46 = vector.shape_cast %45 : vector<1x1x8xf32> to vector<1x8xf32>
    %47 = vector.shape_cast %41 : vector<1x8xf32> to vector<1x1x8xf32>
    tpu.vector_store %arg5[%c0_19, %c1, %c0_20], %47 {strides = array<i32>} : memref<1x2x8xf32, #tpu.memory_space<vmem>>, vector<1x1x8xf32>,
    return
  }
  func.func @transform_0(%arg0: i32) -> (i32, i32) {
    %c0_i32 = arith.constant 0 : i32
    %c0_i32_0 = arith.constant 0 : i32
    return %arg0, %c0_i32 : i32, i32
  }
  func.func @transform_1(%arg0: i32) -> (i32, i32) {
    %c0_i32 = arith.constant 0 : i32
    %c0_i32_0 = arith.constant 0 : i32
    %c0_i32_1 = arith.constant 0 : i32
    return %c0_i32, %c0_i32_0 : i32, i32
  }
  func.func @transform_2(%arg0: i32) -> (i32, i32) {
    %c0_i32 = arith.constant 0 : i32
    %c0_i32_0 = arith.constant 0 : i32
    %c0_i32_1 = arith.constant 0 : i32
    return %c0_i32, %c0_i32_0 : i32, i32
  }
  func.func @transform_3(%arg0: i32) -> (i32, i32, i32) {
    %c0_i32 = arith.constant 0 : i32
    %c0_i32_0 = arith.constant 0 : i32
    %c0_i32_1 = arith.constant 0 : i32
    return %arg0, %c0_i32, %c0_i32_0 : i32, i32, i32
  }
  func.func @transform_4(%arg0: i32) -> (i32, i32, i32) {
    %c0_i32 = arith.constant 0 : i32
    %c0_i32_0 = arith.constant 0 : i32
    %c0_i32_1 = arith.constant 0 : i32
    return %arg0, %c0_i32, %c0_i32_0 : i32, i32, i32
  }
}

</mosaic_0001>

<llo_original>
// kernel: tpu_custom_call.1
$region0: #{tpu_custom_call.1}
  #allocation0 [shape = 'u32[]', space=smem, size = 0x4, offset = 0x4, fixed_abs, tag = 'smem constant byte address 0x4 - core index']
  #allocation1 [shape = 'u32[72,128]{1,0:T(1,128)}', space=vmem, size = 0x9000, scoped, tag = 'internal scratch']
  %s0 = inlined_call_operand.vmem [shape: f32[8,32], index: 0, kind: input, shape index: {}]
  %s1 = inlined_call_operand.vmem [shape: f32[32,8], index: 1, kind: input, shape index: {}]
  %s2 = inlined_call_operand.vmem [shape: f32[1,8], index: 2, kind: input, shape index: {}]
  %s3 = inlined_call_operand.hbm [shape: s32[1,1,8], index: 3, kind: output, shape index: {0}]
  %s4 = inlined_call_operand.hbm [shape: f32[1,2,8], index: 4, kind: output, shape index: {1}]
  %5 = xla_tuple %s3, %s4
  %s6 = sld [smem:[#allocation0]]
  $region30: #{tpu_custom_call.1} parent=0
    _
  %s8 = ssub.s32 1, %s6
  %s9 = scalar_select 0, %s8, %s6
  $region1: #{tpu_custom_call.1} parent=0
    #allocation2 [shape = 'u8[512]{0}', space=vmem, size = 0x400, scoped, tag = 'output window, operand 0, single buffered']
    #allocation3 [shape = 's32[1]{0}', space=sflag, size = 0x4, scoped, tag = 'scoped memory for tpu_custom_call.1']
    #allocation4 [shape = 'u8[1024]{0}', space=vmem, size = 0x400, scoped, tag = 'output window, operand 1, single buffered']
    #allocation5 [shape = 's32[1]{0}', space=sflag, size = 0x4, scoped, tag = 'scoped memory for tpu_custom_call.1']
    %10 = vsyncpa [#allocation3], 0
    %11 = vsyncpa [#allocation5], 0
    // Predicated region
    $region2: #{tpu_custom_call.1} parent=1 // pred_check
      _
    $region3: #{tpu_custom_call.1} parent=1 // pred_check_branch
      %13 = sbr.rel (0) target = $region5
    $region4: #{tpu_custom_call.1} parent=1 // pred_region
      _
    $region5: #{tpu_custom_call.1} parent=1 // pred_fallthru
      _
    // Predicated region
    $region6: #{tpu_custom_call.1} parent=1 // pred_check
      _
    $region7: #{tpu_custom_call.1} parent=1 // pred_check_branch
      %15 = sbr.rel (0) target = $region9
    $region8: #{tpu_custom_call.1} parent=1 // pred_region
      _
    $region9: #{tpu_custom_call.1} parent=1 // pred_fallthru
      _
    // Predicated region
    $region10: #{tpu_custom_call.1} parent=1 // pred_check
      _
    $region11: #{tpu_custom_call.1} parent=1 // pred_check_branch
      %17 = sbr.rel (0) target = $region13
    $region12: #{tpu_custom_call.1} parent=1 // pred_region
      _
    $region13: #{tpu_custom_call.1} parent=1 // pred_fallthru
      _
    %v18 = vld [vmem:[%s0] sm:$0xff]
    %v19 = vld [vmem:[%s1] sm:$0xff]
    %v20 = vld [vmem:[%s1 + $0x8] sm:$0xff]
    %v21 = vld [vmem:[%s1 + $0x10] sm:$0xff]
    %v22 = vld [vmem:[%s1 + $0x18] sm:$0xff]
    %v23 = vld [vmem:[%s2] sm:$0x1]
    %v25 = vperm.slane %v23, 0
    %vm27 = vcmask 261120
    %v29 = vsel %vm27, %v18, 0
    %31 = vmatpush.msra.mxu0 0.0
    %32 = vmatpush.msra.mxu0 0.0
    %33 = vmatpush.msra.mxu0 0.0
    %34 = vmatpush.msra.mxu0 0.0
    %35 = vmatpush.msra.mxu0 0.0
    %36 = vmatpush.msra.mxu0 0.0
    %37 = vmatpush.msra.mxu0 0.0
    %38 = vmatpush.msra.mxu0 0.0
    %39 = vmatpush.msra.mxu0 0.0
    %40 = vmatpush.msra.mxu0 0.0
    %41 = vmatpush.msra.mxu0 0.0
    %42 = vmatpush.msra.mxu0 0.0
    %43 = vmatpush.msra.mxu0 %v22
    %44 = vmatpush.msra.mxu0 %v21
    %45 = vmatpush.msra.mxu0 %v20
    %46 = vmatpush.msra.mxu0 %v19
    %47 = vmatmul.f32.gmra.mxu0 %v29
    %v48 = vpop.f32.mrf.mxu0
    %v49 = vadd.f32 %v25, %v48
    %50 = vdwg.mxu0
    %vm51 = vcmask 64512
    %v52 = vsel %vm51, %v49, -inf
    %53 = vmax.xlane.f32.xlu0 %v52
    %v54 = vpop.xlane.xlu0 %53
    %v55 = vsub.f32 %v49, %v54
    %v56 = vmul.f32 %v55, 1.442695
    %v57 = vpow.pop %v56
    %v58 = vsel %vm51, %v57, 0.0
    %59 = vadd.xlane.f32.xlu0 %v58
    %v60 = vpop.xlane.xlu0 %59
    %v61 = vrcp.pop %v60
    %v62 = vmul.f32 %v60, %v61
    %v63 = vsub.f32 1.0, %v62
    %v64 = vmul.f32 %v61, %v63
    %v65 = vadd.f32 %v61, %v64
    %vm66 = vweird.f32 %v60
    %vm67 = vweird.f32 %v61
    %vm68 = vmor %vm66, %vm67
    %v69 = vsel %vm68, %v61, %v65
    %v70 = vand.u32 2147483647, %v60
    %vm71 = vcmp.eq.f32.partialorder %v70, 8.507059e+37
    %v72 = vand.u32 %v60, 2147483648
    %v73 = vor.u32 1.1754944e-38, %v72
    %v74 = vsel %vm71, %v73, %v69
    %v75 = vmul.f32 %v57, %v74
    %v76 = vlaneseq
    %v77 = vand.u32 %v76, 127
    %vm78 = vcmp.eq.f32.partialorder %v49, %v54
    %v79 = vsel %vm78, %v77, 8
    %v80 = vsel %vm51, %v79, 2147483647
    %v81 = vand.u32 %v80, 65535
    %v82 = vshra.s32 %v80, 16
    %v83 = vcvt.s32.f32 %v81
    %v84 = vcvt.s32.f32 %v82
    %85 = vmin.xlane.f32.xlu0 %v84
    %v86 = vpop.xlane.xlu0 %85
    %vm87 = vcmp.eq.f32.partialorder %v84, %v86
    %v88 = vsel %vm87, %v83, inf
    %89 = vmin.xlane.f32.xlu0 %v88
    %v90 = vpop.xlane.xlu0 %89
    %v91 = vcvt.f32.s32 %v90
    %v92 = vcvt.f32.s32 %v86
    %v93 = vshll.u32 %v92, 16
    %v94 = vadd.s32 %v93, %v91
    %vm95 = vcmp.eq.s32.totalorder %v77, %v94
    %v96 = vsel %vm95, 1, 0
    %v97 = vcvt.s32.f32 %v96
    %v98 = vcvt.s32.f32 %v77
    %v100 = vsel %vm51, %v98, 0
    %v103 = vsel %vm51, %v97, 0
    %105 = vmatpush.xpose.msra.mxu0 0.0
    %106 = vmatpush.xpose.msra.mxu0 0.0
    %107 = vmatpush.xpose.msra.mxu0 0.0
    %108 = vmatpush.xpose.msra.mxu0 0.0
    %109 = vmatpush.xpose.msra.mxu0 0.0
    %110 = vmatpush.xpose.msra.mxu0 0.0
    %111 = vmatpush.xpose.msra.mxu0 0.0
    %112 = vmatpush.xpose.msra.mxu0 0.0
    %113 = vmatpush.xpose.msra.mxu0 0.0
    %114 = vmatpush.xpose.msra.mxu0 0.0
    %115 = vmatpush.xpose.msra.mxu0 0.0
    %116 = vmatpush.xpose.msra.mxu0 0.0
    %117 = vmatpush.xpose.msra.mxu0 0.0
    %118 = vmatpush.xpose.msra.mxu0 0.0
    %119 = vmatpush.xpose.msra.mxu0 0.0
    %120 = vmatpush.xpose.msra.mxu0 %v103
    %121 = vmatmul.f32.gmra.mxu0 %v100
    %v122 = vpop.f32.mrf.mxu0
    %v123 = vadd.f32 0.0, %v122
    %124 = vdwg.mxu0
    %v125 = vcvt.f32.s32.to.zero.pseudo %v123
    %vm126 = vcmask 57344
    %127 = vst.msk [vmem:[#allocation2] sm:$0x1] %vm126, %v125
    %s128 = smul.u32 0, 8
    %v129 = vstv %s128
    %v130 = vadd.s32 %v77, %v129
    %vm131 = vcmp.lt.s32.totalorder %v130, 8
    %v132 = vsel %vm131, 1, 0
    %v133 = vcvt.s32.f32 %v132
    %v135 = vsel %vm51, %v133, 0
    %137 = vmatpush.msra.mxu0 0.0
    %138 = vmatpush.msra.mxu0 0.0
    %139 = vmatpush.msra.mxu0 0.0
    %140 = vmatpush.msra.mxu0 0.0
    %141 = vmatpush.msra.mxu0 0.0
    %142 = vmatpush.msra.mxu0 0.0
    %143 = vmatpush.msra.mxu0 0.0
    %144 = vmatpush.msra.mxu0 0.0
    %145 = vmatpush.msra.mxu0 0.0
    %146 = vmatpush.msra.mxu0 0.0
    %147 = vmatpush.msra.mxu0 0.0
    %148 = vmatpush.msra.mxu0 0.0
    %149 = vmatpush.msra.mxu0 0.0
    %150 = vmatpush.msra.mxu0 0.0
    %151 = vmatpush.msra.mxu0 0.0
    %152 = vmatpush.msra.mxu0 %v97
    %153 = vmatmul.f32.gmra.mxu0 %v135
    %v154 = vpop.f32.mrf.mxu0
    %v155 = vadd.f32 0.0, %v154
    %156 = vdwg.mxu0
    %157 = vmatpush.msra.mxu0 0.0
    %158 = vmatpush.msra.mxu0 0.0
    %159 = vmatpush.msra.mxu0 0.0
    %160 = vmatpush.msra.mxu0 0.0
    %161 = vmatpush.msra.mxu0 0.0
    %162 = vmatpush.msra.mxu0 0.0
    %163 = vmatpush.msra.mxu0 0.0
    %164 = vmatpush.msra.mxu0 0.0
    %165 = vmatpush.msra.mxu0 0.0
    %166 = vmatpush.msra.mxu0 0.0
    %167 = vmatpush.msra.mxu0 0.0
    %168 = vmatpush.msra.mxu0 0.0
    %169 = vmatpush.msra.mxu0 0.0
    %170 = vmatpush.msra.mxu0 0.0
    %171 = vmatpush.msra.mxu0 0.0
    %172 = vmatpush.msra.mxu0 %v75
    %173 = vmatmul.f32.gmra.mxu0 %v135
    %v174 = vpop.f32.mrf.mxu0
    %v175 = vadd.f32 0.0, %v174
    %176 = vdwg.mxu0
    %177 = vst.msk [vmem:[#allocation4] sm:$0x1] %vm126, %v155
    %178 = vst.msk [vmem:[#allocation4 + $0x1] sm:$0x1] %vm126, %v175
    // Predicated region
    $region14: #{tpu_custom_call.1} parent=1 // pred_check
      _
    $region15: #{tpu_custom_call.1} parent=1 // pred_check_branch
      %180 = sbr.rel (0) target = $region17
    $region16: #{tpu_custom_call.1} parent=1 // pred_region
      %182 = vsyncadd [#allocation3], 0
      %s184 = sshll.u32 [#allocation2], 4
      %s185 = int_to_ptr.vmem [resolvable:$true] %s184
      %s186 = sshll.u32 %s3, 4
      %s187 = int_to_ptr.hbm [resolvable:$true] %s186
      %189 = dma.vmem_to_hbm [thread:$0]  %s185, 16, %s187, [#allocation3]
    $region17: #{tpu_custom_call.1} parent=1 // pred_fallthru
      _
    // Predicated region
    $region18: #{tpu_custom_call.1} parent=1 // pred_check
      _
    $region19: #{tpu_custom_call.1} parent=1 // pred_check_branch
      %191 = sbr.rel (0) target = $region21
    $region20: #{tpu_custom_call.1} parent=1 // pred_region
      %193 = vsyncadd [#allocation5], 0
      %s195 = sshll.u32 [#allocation4], 4
      %s196 = int_to_ptr.vmem [resolvable:$true] %s195
      %s197 = sshll.u32 %s4, 4
      %s198 = int_to_ptr.hbm [resolvable:$true] %s197
      %200 = dma.vmem_to_hbm [thread:$0]  %s196, 32, %s198, [#allocation5]
    $region21: #{tpu_custom_call.1} parent=1 // pred_fallthru
      _
    // Predicated region
    $region22: #{tpu_custom_call.1} parent=1 // pred_check
      _
    $region23: #{tpu_custom_call.1} parent=1 // pred_check_branch
      %202 = sbr.rel (0) target = $region25
    $region24: #{tpu_custom_call.1} parent=1 // pred_region
      %204 = dma.done [#allocation3], 16
    $region25: #{tpu_custom_call.1} parent=1 // pred_fallthru
      _
    // Predicated region
    $region26: #{tpu_custom_call.1} parent=1 // pred_check
      _
    $region27: #{tpu_custom_call.1} parent=1 // pred_check_branch
      %206 = sbr.rel (0) target = $region29
    $region28: #{tpu_custom_call.1} parent=1 // pred_region
      %208 = dma.done [#allocation5], 32
    $region29: #{tpu_custom_call.1} parent=1 // pred_fallthru
      _
    %209 = vsyncpa [#allocation3], 1
    %210 = vsyncpa [#allocation5], 1

</llo_original>
